<compile_context>
chip_gen: v7x
topology: tpu7x:2x2x1
jax: 0.10.0
libtpu: 0.0.40
codegen_flags: <defaults>
</compile_context>

<pallas_src>
import jax
import jax.numpy as jnp
from jax.experimental import pallas as pl
from jax.experimental.pallas import tpu as pltpu


def _round_up(n: int, m: int) -> int:
    return ((n + m - 1) // m) * m


def _mlp_kernel(x_ref, w1_ref, b1_ref, w2_ref, b2_ref, o_ref):
    """One batch tile of: o = relu(x @ w1 + b1) @ w2 + b2, stored lane-dense.

    x_ref : [TM, D]  VMEM (batch-tiled, double-buffered by the pipeline)
    w1_ref: [D, Hp]  VMEM (whole array, resident across grid steps)
    b1_ref: [1, Hp]  VMEM (resident)
    w2_ref: [1, Hp]  VMEM (resident; fc2 weight stored as a lane row)
    b2_ref: [1, 1]   SMEM scalar
    o_ref : [1, TM]  VMEM (lane-dense slab row; wrapper reshapes to [B, 1])
    """
    x = x_ref[...]
    w1 = w1_ref[...]

    # Layer 1 on the MXU (operands in the weights' dtype -> bf16-capable on
    # v6e/v7x if the caller stores bf16 params), f32 accumulate.
    h = jnp.dot(x.astype(w1.dtype), w1, preferred_element_type=jnp.float32)
    h = jnp.maximum(h + b1_ref[...], 0.0)                      # [TM, Hp] f32

    # Layer 2: output width is 1, so skip the MXU -- elementwise multiply
    # (VPU) + cross-lane sum (XLU) instead of a width-1 vmatmul.
    y = jnp.sum(h * w2_ref[...], axis=-1)                      # [TM] (lane-major 1-D)

    # Lane-dense, unmasked store of one [1, TM] row per grid step.
    o_ref[...] = (y + b2_ref[0, 0])[None, :].astype(o_ref.dtype)


def regression_mlp(x, w1, b1, w2, b2, *, block_rows=512):
    """Pallas-backed forward pass matching RegressionMLP.forward.

    x:  [B, input_size]           float32 (or bf16)
    w1: [input_size, hidden]      (transposed vs. PyTorch's [hidden, input_size])
    b1: [hidden]
    w2: [hidden, 1] (or [hidden]) (transposed vs. PyTorch's [1, hidden])
    b2: [1]
    returns: [B, 1] float32

    block_rows: batch tile size; must be a multiple of 128 so multi-tile runs
    keep both the x loads and the output stores lane/sublane aligned. Small
    batches collapse to a single 8-aligned tile automatically.
    """
    B, D = x.shape
    H = w1.shape[1]
    assert w1.shape == (D, H)
    assert block_rows % 128 == 0, "block_rows must be a multiple of 128"

    # --- parameter-build-time padding of the hidden dim to a full lane tile ---
    Hp = _round_up(H, 128)
    w1p = jnp.pad(w1, ((0, 0), (0, Hp - H)))                            # [D, Hp]
    b1p = jnp.pad(b1.reshape(1, H).astype(jnp.float32),
                  ((0, 0), (0, Hp - H)))                                # [1, Hp]
    w2p = jnp.pad(w2.reshape(1, H).astype(jnp.float32),
                  ((0, 0), (0, Hp - H)))                                # [1, Hp]
    b2s = b2.reshape(1, 1).astype(jnp.float32)                          # [1, 1] SMEM

    # Batch tile: big tile (128-multiple) for large B, single 8-aligned tile
    # for small B.
    b_aligned = _round_up(B, 8)
    tm = block_rows if block_rows < b_aligned else b_aligned
    n_tiles = pl.cdiv(B, tm)

    out_slab = pl.pallas_call(
        _mlp_kernel,
        # Lane-dense output slab; reshaped to [B, 1] below (layout plumbing only).
        out_shape=jax.ShapeDtypeStruct((1, n_tiles * tm), jnp.float32),
        grid=(n_tiles,),
        in_specs=[
            pl.BlockSpec((tm, D), lambda i: (i, 0)),             # x: batch-tiled
            pl.BlockSpec((D, Hp), lambda i: (0, 0)),             # w1: resident
            pl.BlockSpec((1, Hp), lambda i: (0, 0)),             # b1: resident
            pl.BlockSpec((1, Hp), lambda i: (0, 0)),             # w2 row: resident
            pl.BlockSpec(memory_space=pltpu.MemorySpace.SMEM),   # b2 scalar
        ],
        out_specs=pl.BlockSpec((1, tm), lambda i: (0, i)),
        compiler_params=pltpu.CompilerParams(
            # Batch tiles are independent -> shard across v7x's 2 TensorCores.
            dimension_semantics=("parallel",),
            # Explicit budget: valid on v5e/v6e (128 MiB) and v7x (64 MiB).
            vmem_limit_bytes=32 * 1024 * 1024,
        ),
    )(x, w1p, b1p, w2p, b2s)

    # Slab row -> [B, 1]; trailing padded lanes (if any) are dropped.
    return out_slab.reshape(-1, 1)[:B]


def init_params(key, input_size, hidden_size):
    """Deterministic init mirroring nn.Linear's U(-1/sqrt(fan_in), 1/sqrt(fan_in))."""
    k1, k2, k3, k4 = jax.random.split(key, 4)
    bound1 = 1.0 / jnp.sqrt(jnp.float32(input_size))
    bound2 = 1.0 / jnp.sqrt(jnp.float32(hidden_size))
    w1 = jax.random.uniform(k1, (input_size, hidden_size), jnp.float32,
                            -bound1, bound1)
    b1 = jax.random.uniform(k2, (hidden_size,), jnp.float32, -bound1, bound1)
    w2 = jax.random.uniform(k3, (hidden_size, 1), jnp.float32, -bound2, bound2)
    b2 = jax.random.uniform(k4, (1,), jnp.float32, -bound2, bound2)
    return w1, b1, w2, b2


def _reference(x, w1, b1, w2, b2):
    return jnp.maximum(x @ w1 + b1, 0.0) @ w2 + b2


if __name__ == "__main__":
    # Wine-quality-like shapes: 11 input features, small hidden layer.
    input_size, hidden_size = 11, 32
    key = jax.random.PRNGKey(0)
    kx1, kx2, kp = jax.random.split(key, 3)
    w1, b1, w2, b2 = init_params(kp, input_size, hidden_size)

    # 1) Small batch (single tile, single grid step).
    x_small = jax.random.normal(kx1, (8, input_size), jnp.float32)
    out_small = jax.block_until_ready(regression_mlp(x_small, w1, b1, w2, b2))
    ref_small = _reference(x_small, w1, b1, w2, b2)
    assert out_small.shape == (8, 1)
    assert jnp.allclose(out_small, ref_small, atol=1e-4, rtol=1e-4)

    # 2) Larger batch exercising the pipelined grid (3 tiles, ragged last tile,
    #    lane-dense slab writeback).
    x_big = jax.random.normal(kx2, (300, input_size), jnp.float32)
    out_big = jax.block_until_ready(
        regression_mlp(x_big, w1, b1, w2, b2, block_rows=128))
    ref_big = _reference(x_big, w1, b1, w2, b2)
    assert out_big.shape == (300, 1)
    assert jnp.allclose(out_big, ref_big, atol=1e-4, rtol=1e-4)

    print("KERNEL_OK")
</pallas_src>

<mosaic_0001>
module attributes {stable_mosaic.version = 11 : i64} {
  func.func @_mlp_kernel(%arg0: i32, %arg1: memref<8x11xf32, #tpu.memory_space<vmem>>, %arg2: memref<11x128xf32, #tpu.memory_space<vmem>>, %arg3: memref<1x128xf32, #tpu.memory_space<vmem>>, %arg4: memref<1x128xf32, #tpu.memory_space<vmem>>, %arg5: memref<1x1xf32, #tpu.memory_space<smem>>, %arg6: memref<1x8xf32, #tpu.memory_space<vmem>>) attributes {dimension_semantics = [#tpu.dimension_semantics<parallel>], iteration_bounds = array<i64: 1>, scalar_prefetch = 0 : i64, scratch_operands = 0 : i64, tpu.core_type = #tpu.core_type<tc>, window_params = [{transform_indices = @transform_0, window_bounds = array<i64: 8, 11>}, {pipeline_mode = #tpu.pipeline_mode<synchronous>, transform_indices = @transform_1, window_bounds = array<i64: 11, 128>}, {pipeline_mode = #tpu.pipeline_mode<synchronous>, transform_indices = @transform_2, window_bounds = array<i64: 1, 128>}, {pipeline_mode = #tpu.pipeline_mode<synchronous>, transform_indices = @transform_3, window_bounds = array<i64: 1, 128>}, {transform_indices = @transform_4, window_bounds = array<i64: 1, 1>}, {transform_indices = @transform_5, window_bounds = array<i64: 1, 8>}]} {
    %c0 = arith.constant 0 : index
    %c0_0 = arith.constant 0 : index
    %0 = vector.load %arg1[%c0, %c0_0] : memref<8x11xf32, #tpu.memory_space<vmem>>, vector<8x11xf32>
    %c0_1 = arith.constant 0 : index
    %c0_2 = arith.constant 0 : index
    %1 = vector.load %arg2[%c0_1, %c0_2] : memref<11x128xf32, #tpu.memory_space<vmem>>, vector<11x128xf32>
    %cst = arith.constant dense<0.000000e+00> : vector<8x128xf32>
    %2 = tpu.matmul %0, %1, %cst {dimension_numbers = #tpu.dot_dimension_numbers<[1], [0], [0], [1], [0, 0, 1, 1], [], []>} : vector<8x11xf32>, vector<11x128xf32>, vector<8x128xf32> -> vector<8x128xf32>
    %c0_3 = arith.constant 0 : index
    %c0_4 = arith.constant 0 : index
    %3 = vector.load %arg3[%c0_3, %c0_4] : memref<1x128xf32, #tpu.memory_space<vmem>>, vector<1x128xf32>
    %4 = vector.broadcast %3 : vector<1x128xf32> to vector<8x128xf32>
    %5 = arith.addf %2, %4 : vector<8x128xf32>
    %cst_5 = arith.constant 0.000000e+00 : f32
    %6 = vector.broadcast %cst_5 : f32 to vector<8x128xf32>
    %7 = arith.maximumf %5, %6 : vector<8x128xf32>
    %c0_6 = arith.constant 0 : index
    %c0_7 = arith.constant 0 : index
    %8 = vector.load %arg4[%c0_6, %c0_7] : memref<1x128xf32, #tpu.memory_space<vmem>>, vector<1x128xf32>
    %9 = vector.broadcast %8 : vector<1x128xf32> to vector<8x128xf32>
    %10 = arith.mulf %7, %9 : vector<8x128xf32>
    %cst_8 = arith.constant dense<0.000000e+00> : vector<8xf32>
    %11 = vector.multi_reduction <add>, %10, %cst_8 [1] : vector<8x128xf32> to vector<8xf32>
    %c0_9 = arith.constant 0 : index
    %c0_10 = arith.constant 0 : index
    %12 = memref.load %arg5[%c0_9, %c0_10] : memref<1x1xf32, #tpu.memory_space<smem>>
    %13 = vector.broadcast %12 : f32 to vector<8xf32>
    %14 = arith.addf %11, %13 : vector<8xf32>
    %15 = vector.shape_cast %14 : vector<8xf32> to vector<1x8xf32>
    %c0_11 = arith.constant 0 : index
    %c0_12 = arith.constant 0 : index
    %16 = vector.load %arg6[%c0_11, %c0_12] : memref<1x8xf32, #tpu.memory_space<vmem>>, vector<1x8xf32>
    tpu.vector_store %arg6[%c0_11, %c0_12], %15 {strides = array<i32>} : memref<1x8xf32, #tpu.memory_space<vmem>>, vector<1x8xf32>,
    return
  }
  func.func @transform_0(%arg0: i32) -> (i32, i32) {
    %c0_i32 = arith.constant 0 : i32
    %c0_i32_0 = arith.constant 0 : i32
    return %arg0, %c0_i32 : i32, i32
  }
  func.func @transform_1(%arg0: i32) -> (i32, i32) {
    %c0_i32 = arith.constant 0 : i32
    %c0_i32_0 = arith.constant 0 : i32
    %c0_i32_1 = arith.constant 0 : i32
    return %c0_i32, %c0_i32_0 : i32, i32
  }
  func.func @transform_2(%arg0: i32) -> (i32, i32) {
    %c0_i32 = arith.constant 0 : i32
    %c0_i32_0 = arith.constant 0 : i32
    %c0_i32_1 = arith.constant 0 : i32
    return %c0_i32, %c0_i32_0 : i32, i32
  }
  func.func @transform_3(%arg0: i32) -> (i32, i32) {
    %c0_i32 = arith.constant 0 : i32
    %c0_i32_0 = arith.constant 0 : i32
    %c0_i32_1 = arith.constant 0 : i32
    return %c0_i32, %c0_i32_0 : i32, i32
  }
  func.func @transform_4(%arg0: i32) -> (i32, i32) {
    %c0_i32 = arith.constant 0 : i32
    %c0_i32_0 = arith.constant 0 : i32
    %c0_i32_1 = arith.constant 0 : i32
    return %c0_i32, %c0_i32_0 : i32, i32
  }
  func.func @transform_5(%arg0: i32) -> (i32, i32) {
    %c0_i32 = arith.constant 0 : i32
    %c0_i32_0 = arith.constant 0 : i32
    return %c0_i32, %arg0 : i32, i32
  }
}

</mosaic_0001>

<llo_original>
// kernel: tpu_custom_call.1
$region0: #{tpu_custom_call.1}
  #allocation0 [shape = 'u32[]', space=smem, size = 0x4, offset = 0x4, fixed_abs, tag = 'smem constant byte address 0x4 - core index']
  #allocation1 [shape = 'u32[144,128]{1,0:T(1,128)}', space=vmem, size = 0x12000, scoped, tag = 'internal scratch']
  #allocation2 [shape = 'f32[1,1]{1,0:T(1,128)S(6)}', space=smem, size = 0x200, scoped, tag = 'scoped memory for tpu_custom_call.1']
  %s0 = inlined_call_operand.hbm [shape: f32[8,11], index: 0, kind: input, shape index: {}]
  %s1 = inlined_call_operand.hbm [shape: f32[11,128], index: 1, kind: input, shape index: {}]
  %s2 = inlined_call_operand.vmem [shape: f32[1,128], index: 2, kind: input, shape index: {}]
  %s3 = inlined_call_operand.vmem [shape: f32[1,128], index: 3, kind: input, shape index: {}]
  %s4 = inlined_call_operand.<no memory space> [shape: f32[1,1], index: 4, kind: input, shape index: {}]
  %s5 = inlined_call_operand.hbm [shape: f32[1,8], index: 5, kind: output, shape index: {}]
  %s6 = sld [smem:[#allocation0]]
  $region38: #{tpu_custom_call.1} parent=0
    _
  %s8 = ssub.s32 1, %s6
  %s9 = scalar_select 0, %s8, %s6
  %10 = sst [smem:[#allocation2]] %s4
  $region1: #{tpu_custom_call.1} parent=0
    #allocation3 [shape = 'u8[4096]{0}', space=vmem, size = 0x1000, scoped, tag = 'input window, operand 0, single buffered']
    #allocation4 [shape = 's32[1]{0}', space=sflag, size = 0x4, scoped, tag = 'scoped memory for tpu_custom_call.1']
    #allocation5 [shape = 's32[1]{0}', space=sflag, size = 0x4, scoped, tag = 'scoped memory for tpu_custom_call.1']
    #allocation6 [shape = 'u8[8192]{0}', space=vmem, size = 0x2000, scoped, tag = 'input window, operand 1, single buffered']
    #allocation7 [shape = 's32[1]{0}', space=sflag, size = 0x4, scoped, tag = 'scoped memory for tpu_custom_call.1']
    #allocation8 [shape = 'u8[512]{0}', space=vmem, size = 0x400, scoped, tag = 'output window, operand 0, single buffered']
    %11 = vsyncpa [#allocation4], 0
    %12 = vsyncpa [#allocation7], 0
    %13 = vsyncpa [#allocation5], 0
    // Predicated region
    $region2: #{tpu_custom_call.1} parent=1 // pred_check
      _
    $region3: #{tpu_custom_call.1} parent=1 // pred_check_branch
      %15 = sbr.rel (0) target = $region5
    $region4: #{tpu_custom_call.1} parent=1 // pred_region
      %s17 = ssub.s32 128, 128
      %18 = vsyncadd [#allocation4], %s17
      %s20 = sshll.u32 [#allocation3], 4
      %s21 = int_to_ptr.vmem [resolvable:$true] %s20
      %23 = dma.hbm_to_vmem [thread:$0]  %s0, 128, %s21, [#allocation4]
    $region5: #{tpu_custom_call.1} parent=1 // pred_fallthru
      _
    // Predicated region
    $region6: #{tpu_custom_call.1} parent=1 // pred_check
      _
    $region7: #{tpu_custom_call.1} parent=1 // pred_check_branch
      %25 = sbr.rel (0) target = $region9
    $region8: #{tpu_custom_call.1} parent=1 // pred_region
      %s27 = ssub.s32 256, 256
      %28 = vsyncadd [#allocation7], %s27
      %s29 = sshll.u32 [#allocation6], 4
      %s30 = int_to_ptr.vmem [resolvable:$true] %s29
      %35 = dma.hbm_to_vmem [thread:$0]  %s1, 256, %s30, [#allocation7], 128, 128, 8
    $region9: #{tpu_custom_call.1} parent=1 // pred_fallthru
      _
    // Predicated region
    $region10: #{tpu_custom_call.1} parent=1 // pred_check
      _
    $region11: #{tpu_custom_call.1} parent=1 // pred_check_branch
      %37 = sbr.rel (0) target = $region13
    $region12: #{tpu_custom_call.1} parent=1 // pred_region
      _
    $region13: #{tpu_custom_call.1} parent=1 // pred_fallthru
      _
    // Predicated region
    $region14: #{tpu_custom_call.1} parent=1 // pred_check
      _
    $region15: #{tpu_custom_call.1} parent=1 // pred_check_branch
      %39 = sbr.rel (0) target = $region17
    $region16: #{tpu_custom_call.1} parent=1 // pred_region
      _
    $region17: #{tpu_custom_call.1} parent=1 // pred_fallthru
      _
    // Predicated region
    $region18: #{tpu_custom_call.1} parent=1 // pred_check
      _
    $region19: #{tpu_custom_call.1} parent=1 // pred_check_branch
      %41 = sbr.rel (0) target = $region21
    $region20: #{tpu_custom_call.1} parent=1 // pred_region
      _
    $region21: #{tpu_custom_call.1} parent=1 // pred_fallthru
      _
    // Predicated region
    $region22: #{tpu_custom_call.1} parent=1 // pred_check
      _
    $region23: #{tpu_custom_call.1} parent=1 // pred_check_branch
      %43 = sbr.rel (0) target = $region25
    $region24: #{tpu_custom_call.1} parent=1 // pred_region
      %44 = dma.done [#allocation4], 128
    $region25: #{tpu_custom_call.1} parent=1 // pred_fallthru
      _
    // Predicated region
    $region26: #{tpu_custom_call.1} parent=1 // pred_check
      _
    $region27: #{tpu_custom_call.1} parent=1 // pred_check_branch
      %46 = sbr.rel (0) target = $region29
    $region28: #{tpu_custom_call.1} parent=1 // pred_region
      %47 = dma.done [#allocation7], 256
    $region29: #{tpu_custom_call.1} parent=1 // pred_fallthru
      _
    %v48 = vld [vmem:[#allocation3] sm:$0xff]
    %v49 = vld [vmem:[#allocation6] sm:$0xff]
    %v50 = vld [vmem:[#allocation6 + $0x8] sm:$0x7]
    %v51 = vld [vmem:[%s2] sm:$0x1]
    %v53 = vlaneseq
    %v54 = vshrl.u32 %v53, 7
    %v55 = vsub.s32 0, %v54
    %v56 = vrot.slane %v51, %v55
    %vm58 = vcmask 89088
    %v60 = vsel %vm58, %v48, 0
    %vm62 = vcmask 1042432
    %v64 = vsel %vm62, %v50, 0
    %66 = vmatprep.subr.mxu0 0.0
    %67 = vmatpush1.msra.mxu0 %v49
    %68 = vmatprep.subr.mxu0 0.0
    %69 = vmatpush1.msra.mxu0 %v64
    %70 = vmatprep.subr.mxu0 0.0
    %71 = vmatpush1.msra.mxu0 0.0
    %72 = vmatprep.subr.mxu0 0.0
    %73 = vmatpush1.msra.mxu0 0.0
    %74 = vmatprep.subr.mxu0 0.0
    %75 = vmatpush1.msra.mxu0 0.0
    %76 = vmatprep.subr.mxu0 0.0
    %77 = vmatpush1.msra.mxu0 0.0
    %78 = vmatprep.subr.mxu0 0.0
    %79 = vmatpush1.msra.mxu0 0.0
    %80 = vmatprep.subr.mxu0 0.0
    %81 = vmatpush1.msra.mxu0 0.0
    %82 = vmatprep.subr.mxu0 0.0
    %83 = vmatpush1.msra.mxu0 0.0
    %84 = vmatprep.subr.mxu0 0.0
    %85 = vmatpush1.msra.mxu0 0.0
    %86 = vmatprep.subr.mxu0 0.0
    %87 = vmatpush1.msra.mxu0 0.0
    %88 = vmatprep.subr.mxu0 0.0
    %89 = vmatpush1.msra.mxu0 0.0
    %90 = vmatprep.subr.mxu0 0.0
    %91 = vmatpush1.msra.mxu0 0.0
    %92 = vmatprep.subr.mxu0 0.0
    %93 = vmatpush1.msra.mxu0 0.0
    %94 = vmatprep.subr.mxu0 0.0
    %95 = vmatpush1.msra.mxu0 0.0
    %96 = vmatprep.subr.mxu0 0.0
    %97 = vmatpush1.msra.mxu0 0.0
    %98 = vmatprep.subr.mxu0 0.0
    %99 = vmatpush1.msra.mxu0 0.0
    %100 = vmatprep.subr.mxu0 0.0
    %101 = vmatpush1.msra.mxu0 0.0
    %102 = vmatprep.subr.mxu0 0.0
    %103 = vmatpush1.msra.mxu0 0.0
    %104 = vmatprep.subr.mxu0 0.0
    %105 = vmatpush1.msra.mxu0 0.0
    %106 = vmatprep.subr.mxu0 0.0
    %107 = vmatpush1.msra.mxu0 0.0
    %108 = vmatprep.subr.mxu0 0.0
    %109 = vmatpush1.msra.mxu0 0.0
    %110 = vmatprep.subr.mxu0 0.0
    %111 = vmatpush1.msra.mxu0 0.0
    %112 = vmatprep.subr.mxu0 0.0
    %113 = vmatpush1.msra.mxu0 0.0
    %114 = vmatprep.subr.mxu0 0.0
    %115 = vmatpush1.msra.mxu0 0.0
    %116 = vmatprep.subr.mxu0 0.0
    %117 = vmatpush1.msra.mxu0 0.0
    %118 = vmatprep.subr.mxu0 0.0
    %119 = vmatpush1.msra.mxu0 0.0
    %120 = vmatprep.subr.mxu0 0.0
    %121 = vmatpush1.msra.mxu0 0.0
    %122 = vmatprep.subr.mxu0 0.0
    %123 = vmatpush1.msra.mxu0 0.0
    %124 = vmatprep.subr.mxu0 0.0
    %125 = vmatpush1.msra.mxu0 0.0
    %126 = vmatprep.subr.mxu0 0.0
    %127 = vmatpush1.msra.mxu0 0.0
    %128 = vmatprep.subr.mxu0 0.0
    %129 = vmatpush1.msra.mxu0 0.0
    %130 = vmatprep.mubr.f32.mxu0 0.0
    %131 = vmatmul.mubr.f32.gmra.mrb[0].mxu0 %v60
    %v132 = vpop.f32.mrb[0].mxu0
    %v133 = vadd.f32 %v56, %v132
    %v134 = vpop.f32.mrb[0].mxu0
    %135 = vdwg.mxu0
    %v136 = vmax.f32 %v133, 0.0
    %v137 = vld [vmem:[%s3] sm:$0x1]
    %v139 = vlaneseq
    %v140 = vshrl.u32 %v139, 7
    %v141 = vsub.s32 0, %v140
    %v142 = vrot.slane %v137, %v141
    %v144 = vmul.f32 %v136, %v142
    %145 = vadd.xlane.f32.xlu0 %v144
    %v146 = vpop.xlane.xlu0 %145
    %s147 = sld [smem:[#allocation2]]
    %v148 = vstv %s147
    %v149 = vadd.f32 %v146, %v148
    %v151 = vlaneseq
    %v152 = vand.u32 %v151, 127
    %v153 = vlaneseq
    %v154 = vshrl.u32 %v153, 7
    %v155 = vsub.s32 %v152, %v154
    %v156 = vrot.slane %v149, %v155
    %vm158 = vcmask 57344
    %159 = vst.msk [vmem:[#allocation8] sm:$0x1] %vm158, %v156
    // Predicated region
    $region30: #{tpu_custom_call.1} parent=1 // pred_check
      _
    $region31: #{tpu_custom_call.1} parent=1 // pred_check_branch
      %161 = sbr.rel (0) target = $region33
    $region32: #{tpu_custom_call.1} parent=1 // pred_region
      %s163 = ssub.s32 16, 16
      %164 = vsyncadd [#allocation5], %s163
      %s166 = sshll.u32 [#allocation8], 4
      %s167 = int_to_ptr.vmem [resolvable:$true] %s166
      %169 = dma.vmem_to_hbm [thread:$0]  %s167, 16, %s5, [#allocation5]
    $region33: #{tpu_custom_call.1} parent=1 // pred_fallthru
      _
    // Predicated region
    $region34: #{tpu_custom_call.1} parent=1 // pred_check
      _
    $region35: #{tpu_custom_call.1} parent=1 // pred_check_branch
      %171 = sbr.rel (0) target = $region37
    $region36: #{tpu_custom_call.1} parent=1 // pred_region
      %172 = dma.done [#allocation5], 16
    $region37: #{tpu_custom_call.1} parent=1 // pred_fallthru
      _
    %173 = vsyncpa [#allocation4], 1
    %174 = vsyncpa [#allocation7], 1
    %175 = vsyncpa [#allocation5], 1

</llo_original>
